<compile_context>
chip_gen: v5e
topology: v5e:2x2
jax: 0.10.0
libtpu: 0.0.40
codegen_flags: <defaults>
</compile_context>

<pallas_src>
import jax
import jax.numpy as jnp
from jax.experimental import pallas as pl
from jax.experimental.pallas import tpu as pltpu

# ---- module hyper-parameters (small shapes consistent with EEGNet_features) ----
B        = 2
CHANS    = 4              # Chans
SAMPLES  = 64             # Samples
KERN_LEN = 16             # kernLenght (scaled down from 64 for the small shapes)
F1, D, F2 = 4, 2, 8
POOL1, POOL2 = 4, 8
K2       = 16             # block2 depthwise temporal kernel (fixed in the module)
BN_EPS   = 1e-5

PAD1_L = KERN_LEN // 2 - 1            # 7
PAD1_R = KERN_LEN - KERN_LEN // 2     # 8
PAD2_L, PAD2_R = 7, 8                 # fixed in the module

GD   = F1 * D                         # 8   depthwise output channels
BC   = B * CHANS                      # 8   input rows  (batch folded on sublanes)
BGD  = B * GD                         # 16  block1 output rows
BF2  = B * F2                         # 16  block2 output rows
T1   = SAMPLES                        # 64  block1 "same" temporal length
T1P  = T1 // POOL1                    # 16
T2   = T1P                            # 16  block2 depthwise output length
T2P  = T2 // POOL2                    # 2
LT   = 128                            # lane width of every in-kernel activation tile
XPW  = 2 * LT                         # 256 padded-input / pooled-padded lane width
CK1  = KERN_LEN * BC                  # 128 block1 im2col contraction depth
CK2  = K2 * BGD                       # 256 block2 contraction depth
OUT_FEATS = F2 * T2P                  # 16


def eegnet_kernel(xp_ref, w1_ref, b1_ref, p1_ref, w2_ref, b3_ref, p2_ref,
                  out_ref, xr_ref, zpc_ref):
    # ---- block1 im2col: XR[k*BC + r, t] = xpad[r, t + k]  (16 aligned sublane writes)
    for k in range(KERN_LEN):
        xr_ref[k * BC:(k + 1) * BC, :] = xp_ref[:, k:k + LT]

    # temporal conv + BN1 + depthwise spatial conv + BN2 -> one 128-deep MXU matmul
    z = jnp.dot(w1_ref[...], xr_ref[...], preferred_element_type=jnp.float32)   # (BGD, LT)
    z = z + b1_ref[...]                                                          # fused BN bias
    z = jnp.where(z > 0, z, jnp.exp(jnp.minimum(z, 0.0)) - 1.0)                  # ELU

    # AvgPool2d((1,4)) + block2 ZeroPad2d((7,8)) as one constant matmul (zero tail columns)
    zp = jnp.dot(z, p1_ref[...], preferred_element_type=jnp.float32)             # (BGD, XPW)

    # block2: 16 lane-shifted copies into aligned sublane blocks of a scratch, then ONE
    # 256-deep matmul fusing depthwise(1,16) + pointwise(1,1) + BN3 scale.
    for k in range(K2):
        zpc_ref[k * BGD:(k + 1) * BGD, :] = zp[:, k:k + LT]
    a = jnp.dot(w2_ref[...], zpc_ref[...], preferred_element_type=jnp.float32)   # (BF2, LT)
    a = a + b3_ref[...]                                                           # BN3 bias
    a = jnp.where(a > 0, a, jnp.exp(jnp.minimum(a, 0.0)) - 1.0)                   # ELU

    # AvgPool2d((1,8)) restricted to the T2 valid columns as one constant matmul
    out_ref[...] = jnp.dot(a, p2_ref[...], preferred_element_type=jnp.float32)    # (BF2, T2P)
    # TODO(synk): both Dropout(p=0.25) layers omitted (eval-mode identity).


def eegnet_forward(x, p):
    """x: (B, Chans, Samples, 1) -- the layout the PyTorch module receives."""
    nb = x.shape[0]
    assert nb == B
    # torch permute(0,3,1,2) + squeeze is a free reshape; ZeroPad2d((7,8)) is the single
    # real host-side HLO (padded out to 256 lanes so in-kernel tap slices stay in bounds).
    xp = jnp.pad(x.reshape(nb * CHANS, SAMPLES),
                 ((0, 0), (PAD1_L, XPW - SAMPLES - PAD1_L)))                      # (BC, XPW)

    def cspec(shape):
        nd = len(shape)
        return pl.BlockSpec(shape, lambda i, nd=nd: (0,) * nd)

    out = pl.pallas_call(
        eegnet_kernel,
        out_shape=jax.ShapeDtypeStruct((BF2, T2P), jnp.float32),
        grid=(1,),                       # single step: whole batch folded on sublanes
        in_specs=[
            cspec((BC, XPW)),            # zero-padded input
            cspec((BGD, CK1)),           # fused block1 weights (block-diag over batch)
            cspec((BGD, 1)),             # fused BN1/BN2 bias
            cspec((LT, XPW)),            # pool1 + pad2 constant matrix
            cspec((BF2, CK2)),           # fused block2 weights (block-diag over batch)
            cspec((BF2, 1)),             # BN3 bias
            cspec((LT, T2P)),            # pool2 constant matrix
        ],
        out_specs=cspec((BF2, T2P)),
        scratch_shapes=[pltpu.VMEM((CK1, LT), jnp.float32),    # block1 im2col
                        pltpu.VMEM((CK2, LT), jnp.float32)],   # block2 shifted taps
        compiler_params=pltpu.CompilerParams(dimension_semantics=("arbitrary",)),
    )(xp, p["w1big"], p["b1big"], p["p1"], p["w2big"], p["b3big"], p["p2"])

    # rows are b*F2+f, so a row-major reshape matches torch's reshape(B, -1).
    return out.reshape(nb, OUT_FEATS)


def make_params(key):
    ks = jax.random.split(key, 7)
    w1   = 0.3 * jax.random.normal(ks[0], (F1, KERN_LEN), jnp.float32)  # Conv2d(1,F1,(1,K))
    wdw  = 0.3 * jax.random.normal(ks[1], (GD, CHANS), jnp.float32)     # Conv2d(F1,GD,(C,1),groups=F1)
    wdw2 = 0.3 * jax.random.normal(ks[2], (GD, K2), jnp.float32)        # Conv2d(GD,GD,(1,16),groups=GD)
    wpw  = 0.3 * jax.random.normal(ks[3], (F2, GD), jnp.float32)        # Conv2d(GD,F2,(1,1))

    def bn(k, n):
        kg, kb = jax.random.split(k)
        gamma = 1.0 + 0.1 * jax.random.normal(kg, (n,), jnp.float32)
        beta  = 0.1 * jax.random.normal(kb, (n,), jnp.float32)
        mean  = jnp.zeros((n,), jnp.float32)
        var   = jnp.ones((n,), jnp.float32)
        scale = gamma / jnp.sqrt(var + BN_EPS)
        bias  = beta - mean * scale
        return scale, bias

    s1, b1 = bn(ks[4], F1)
    s2, b2 = bn(ks[5], GD)
    s3, b3 = bn(ks[6], F2)

    eye_b = jnp.eye(B, dtype=jnp.float32)
    fidx  = jnp.arange(GD) // D

    # block1 fold: W1e[g,c,k] = s2[g]*wdw[g,c]*s1[f]*w1[f,k];  b1e[g] = BN1/BN2 bias.
    w1e = (s2[:, None, None] * wdw[:, :, None]
           * (s1[fidx][:, None] * w1[fidx])[:, None, :])                # (GD, C, K)
    b1e = s2 * b1[fidx] * wdw.sum(axis=1) + b2                          # (GD,)
    # W1big[b*GD+g, k*BC + b*C + c] = w1e[g,c,k]   (block-diag over the batch sublanes)
    w1big = jnp.einsum('gck,ab->agkbc', w1e, eye_b).reshape(BGD, CK1)
    b1big = jnp.tile(b1e, B).reshape(BGD, 1)

    # pool1 (/4) + ZeroPad2d((7,8)): lane t (<SAMPLES) -> column PAD2_L + t//4, rest zero.
    t  = jnp.arange(LT)
    w  = jnp.arange(XPW)
    p1 = ((w[None, :] == PAD2_L + t[:, None] // POOL1)
          & (t[:, None] < SAMPLES)).astype(jnp.float32) / POOL1         # (LT, XPW)

    # block2 fold: W2e[f,g,k2] = s3[f]*wpw[f,g]*wdw2[g,k2]
    w2e = s3[:, None, None] * wpw[:, :, None] * wdw2[None, :, :]        # (F2, GD, K2)
    # W2big[b*F2+f, k2*BGD + b*GD + g] = w2e[f,g,k2]
    w2big = jnp.einsum('fgk,ab->afkbg', w2e, eye_b).reshape(BF2, CK2)
    b3big = jnp.tile(b3, B).reshape(BF2, 1)

    # pool2 (/8) restricted to the T2 valid columns.
    p2 = ((t[:, None] // POOL2 == jnp.arange(T2P)[None, :])
          & (t[:, None] < T2)).astype(jnp.float32) / POOL2              # (LT, T2P)

    # zero-tail invariants the kernel's junk lanes rely on (per review).
    assert bool(jnp.all(p1[SAMPLES:, :] == 0))
    assert bool(jnp.all(p1[:, PAD2_L + T1P:] == 0))
    assert bool(jnp.all(p2[T2:, :] == 0))

    raw = dict(w1=w1, wdw=wdw, wdw2=wdw2, wpw=wpw,
               s1=s1, b1=b1, s2=s2, b2=b2, s3=s3, b3=b3)
    packed = dict(w1big=w1big, b1big=b1big, p1=p1, w2big=w2big, b3big=b3big, p2=p2)
    return raw, packed


def eegnet_ref(x, p):
    """Plain-JAX, matmul-free (exact f32) reference mirroring the PyTorch forward (eval)."""
    nb = x.shape[0]
    xin = x.reshape(nb, CHANS, SAMPLES)
    xp  = jnp.pad(xin, ((0, 0), (0, 0), (PAD1_L, PAD1_R)))
    y = jnp.zeros((nb, F1, CHANS, SAMPLES), jnp.float32)
    for k in range(KERN_LEN):
        y = y + p['w1'][None, :, None, k:k + 1] * xp[:, None, :, k:k + SAMPLES]
    y = y * p['s1'][None, :, None, None] + p['b1'][None, :, None, None]
    yg = y[:, jnp.arange(GD) // D]                                   # (B, GD, C, T1)
    z = (p['wdw'][None, :, :, None] * yg).sum(axis=2)                # (B, GD, T1)
    z = z * p['s2'][None, :, None] + p['b2'][None, :, None]
    z = jnp.where(z > 0, z, jnp.exp(jnp.minimum(z, 0.0)) - 1.0)
    z = z.reshape(nb, GD, T1P, POOL1).mean(-1)
    zpad = jnp.pad(z, ((0, 0), (0, 0), (PAD2_L, PAD2_R)))
    a = jnp.zeros((nb, GD, T2), jnp.float32)
    for k in range(K2):
        a = a + p['wdw2'][None, :, k:k + 1] * zpad[:, :, k:k + T2]
    bb = (p['wpw'][None, :, :, None] * a[:, None, :, :]).sum(axis=2)  # (B, F2, T2)
    bb = bb * p['s3'][None, :, None] + p['b3'][None, :, None]
    bb = jnp.where(bb > 0, bb, jnp.exp(jnp.minimum(bb, 0.0)) - 1.0)
    bb = bb.reshape(nb, F2, T2P, POOL2).mean(-1)
    return bb.reshape(nb, -1)


if __name__ == "__main__":
    key = jax.random.PRNGKey(0)
    kx, kp = jax.random.split(key)
    x = jax.random.normal(kx, (B, CHANS, SAMPLES, 1), jnp.float32)
    raw, packed = make_params(kp)

    fwd = jax.jit(eegnet_forward)
    out = jax.block_until_ready(fwd(x, packed))
    assert out.shape == (B, OUT_FEATS), out.shape

    ref = jax.block_until_ready(eegnet_ref(x, raw))
    max_diff = float(jnp.max(jnp.abs(out - ref)))
    assert max_diff < 1e-3, f"mismatch vs reference: {max_diff}"

    print("KERNEL_OK")
</pallas_src>

<mosaic_0001>
module attributes {stable_mosaic.version = 11 : i64} {
  func.func @eegnet_kernel(%arg0: i32, %arg1: memref<8x256xf32, #tpu.memory_space<vmem>>, %arg2: memref<16x128xf32, #tpu.memory_space<vmem>>, %arg3: memref<16x1xf32, #tpu.memory_space<vmem>>, %arg4: memref<128x256xf32, #tpu.memory_space<vmem>>, %arg5: memref<16x256xf32, #tpu.memory_space<vmem>>, %arg6: memref<16x1xf32, #tpu.memory_space<vmem>>, %arg7: memref<128x2xf32, #tpu.memory_space<vmem>>, %arg8: memref<16x2xf32, #tpu.memory_space<vmem>>, %arg9: memref<128x128xf32, #tpu.memory_space<vmem>>, %arg10: memref<256x128xf32, #tpu.memory_space<vmem>>) attributes {dimension_semantics = [#tpu.dimension_semantics<arbitrary>], iteration_bounds = array<i64: 1>, scalar_prefetch = 0 : i64, scratch_operands = 2 : i64, tpu.core_type = #tpu.core_type<tc>, window_params = [{pipeline_mode = #tpu.pipeline_mode<synchronous>, transform_indices = @transform_0, window_bounds = array<i64: 8, 256>}, {pipeline_mode = #tpu.pipeline_mode<synchronous>, transform_indices = @transform_1, window_bounds = array<i64: 16, 128>}, {pipeline_mode = #tpu.pipeline_mode<synchronous>, transform_indices = @transform_2, window_bounds = array<i64: 16, 1>}, {pipeline_mode = #tpu.pipeline_mode<synchronous>, transform_indices = @transform_3, window_bounds = array<i64: 128, 256>}, {pipeline_mode = #tpu.pipeline_mode<synchronous>, transform_indices = @transform_4, window_bounds = array<i64: 16, 256>}, {pipeline_mode = #tpu.pipeline_mode<synchronous>, transform_indices = @transform_5, window_bounds = array<i64: 16, 1>}, {pipeline_mode = #tpu.pipeline_mode<synchronous>, transform_indices = @transform_6, window_bounds = array<i64: 128, 2>}, {pipeline_mode = #tpu.pipeline_mode<synchronous>, transform_indices = @transform_7, window_bounds = array<i64: 16, 2>}]} {
    %c0 = arith.constant 0 : index
    %c0_0 = arith.constant 0 : index
    %0 = vector.load %arg1[%c0, %c0_0] : memref<8x256xf32, #tpu.memory_space<vmem>>, vector<8x128xf32>
    %c0_1 = arith.constant 0 : index
    %c0_2 = arith.constant 0 : index
    %1 = vector.load %arg9[%c0_1, %c0_2] : memref<128x128xf32, #tpu.memory_space<vmem>>, vector<8x128xf32>
    tpu.vector_store %arg9[%c0_1, %c0_2], %0 {strides = array<i32>} : memref<128x128xf32, #tpu.memory_space<vmem>>, vector<8x128xf32>,
    %c0_3 = arith.constant 0 : index
    %c1 = arith.constant 1 : index
    %2 = vector.load %arg1[%c0_3, %c1] : memref<8x256xf32, #tpu.memory_space<vmem>>, vector<8x128xf32>
    %c8 = arith.constant 8 : index
    %c0_4 = arith.constant 0 : index
    %3 = vector.load %arg9[%c8, %c0_4] : memref<128x128xf32, #tpu.memory_space<vmem>>, vector<8x128xf32>
    tpu.vector_store %arg9[%c8, %c0_4], %2 {strides = array<i32>} : memref<128x128xf32, #tpu.memory_space<vmem>>, vector<8x128xf32>,
    %c0_5 = arith.constant 0 : index
    %c2 = arith.constant 2 : index
    %4 = vector.load %arg1[%c0_5, %c2] : memref<8x256xf32, #tpu.memory_space<vmem>>, vector<8x128xf32>
    %c16 = arith.constant 16 : index
    %c0_6 = arith.constant 0 : index
    %5 = vector.load %arg9[%c16, %c0_6] : memref<128x128xf32, #tpu.memory_space<vmem>>, vector<8x128xf32>
    tpu.vector_store %arg9[%c16, %c0_6], %4 {strides = array<i32>} : memref<128x128xf32, #tpu.memory_space<vmem>>, vector<8x128xf32>,
    %c0_7 = arith.constant 0 : index
    %c3 = arith.constant 3 : index
    %6 = vector.load %arg1[%c0_7, %c3] : memref<8x256xf32, #tpu.memory_space<vmem>>, vector<8x128xf32>
    %c24 = arith.constant 24 : index
    %c0_8 = arith.constant 0 : index
    %7 = vector.load %arg9[%c24, %c0_8] : memref<128x128xf32, #tpu.memory_space<vmem>>, vector<8x128xf32>
    tpu.vector_store %arg9[%c24, %c0_8], %6 {strides = array<i32>} : memref<128x128xf32, #tpu.memory_space<vmem>>, vector<8x128xf32>,
    %c0_9 = arith.constant 0 : index
    %c4 = arith.constant 4 : index
    %8 = vector.load %arg1[%c0_9, %c4] : memref<8x256xf32, #tpu.memory_space<vmem>>, vector<8x128xf32>
    %c32 = arith.constant 32 : index
    %c0_10 = arith.constant 0 : index
    %9 = vector.load %arg9[%c32, %c0_10] : memref<128x128xf32, #tpu.memory_space<vmem>>, vector<8x128xf32>
    tpu.vector_store %arg9[%c32, %c0_10], %8 {strides = array<i32>} : memref<128x128xf32, #tpu.memory_space<vmem>>, vector<8x128xf32>,
    %c0_11 = arith.constant 0 : index
    %c5 = arith.constant 5 : index
    %10 = vector.load %arg1[%c0_11, %c5] : memref<8x256xf32, #tpu.memory_space<vmem>>, vector<8x128xf32>
    %c40 = arith.constant 40 : index
    %c0_12 = arith.constant 0 : index
    %11 = vector.load %arg9[%c40, %c0_12] : memref<128x128xf32, #tpu.memory_space<vmem>>, vector<8x128xf32>
    tpu.vector_store %arg9[%c40, %c0_12], %10 {strides = array<i32>} : memref<128x128xf32, #tpu.memory_space<vmem>>, vector<8x128xf32>,
    %c0_13 = arith.constant 0 : index
    %c6 = arith.constant 6 : index
    %12 = vector.load %arg1[%c0_13, %c6] : memref<8x256xf32, #tpu.memory_space<vmem>>, vector<8x128xf32>
    %c48 = arith.constant 48 : index
    %c0_14 = arith.constant 0 : index
    %13 = vector.load %arg9[%c48, %c0_14] : memref<128x128xf32, #tpu.memory_space<vmem>>, vector<8x128xf32>
    tpu.vector_store %arg9[%c48, %c0_14], %12 {strides = array<i32>} : memref<128x128xf32, #tpu.memory_space<vmem>>, vector<8x128xf32>,
    %c0_15 = arith.constant 0 : index
    %c7 = arith.constant 7 : index
    %14 = vector.load %arg1[%c0_15, %c7] : memref<8x256xf32, #tpu.memory_space<vmem>>, vector<8x128xf32>
    %c56 = arith.constant 56 : index
    %c0_16 = arith.constant 0 : index
    %15 = vector.load %arg9[%c56, %c0_16] : memref<128x128xf32, #tpu.memory_space<vmem>>, vector<8x128xf32>
    tpu.vector_store %arg9[%c56, %c0_16], %14 {strides = array<i32>} : memref<128x128xf32, #tpu.memory_space<vmem>>, vector<8x128xf32>,
    %c0_17 = arith.constant 0 : index
    %c8_18 = arith.constant 8 : index
    %16 = vector.load %arg1[%c0_17, %c8_18] : memref<8x256xf32, #tpu.memory_space<vmem>>, vector<8x128xf32>
    %c64 = arith.constant 64 : index
    %c0_19 = arith.constant 0 : index
    %17 = vector.load %arg9[%c64, %c0_19] : memref<128x128xf32, #tpu.memory_space<vmem>>, vector<8x128xf32>
    tpu.vector_store %arg9[%c64, %c0_19], %16 {strides = array<i32>} : memref<128x128xf32, #tpu.memory_space<vmem>>, vector<8x128xf32>,
    %c0_20 = arith.constant 0 : index
    %c9 = arith.constant 9 : index
    %18 = vector.load %arg1[%c0_20, %c9] : memref<8x256xf32, #tpu.memory_space<vmem>>, vector<8x128xf32>
    %c72 = arith.constant 72 : index
    %c0_21 = arith.constant 0 : index
    %19 = vector.load %arg9[%c72, %c0_21] : memref<128x128xf32, #tpu.memory_space<vmem>>, vector<8x128xf32>
    tpu.vector_store %arg9[%c72, %c0_21], %18 {strides = array<i32>} : memref<128x128xf32, #tpu.memory_space<vmem>>, vector<8x128xf32>,
    %c0_22 = arith.constant 0 : index
    %c10 = arith.constant 10 : index
    %20 = vector.load %arg1[%c0_22, %c10] : memref<8x256xf32, #tpu.memory_space<vmem>>, vector<8x128xf32>
    %c80 = arith.constant 80 : index
    %c0_23 = arith.constant 0 : index
    %21 = vector.load %arg9[%c80, %c0_23] : memref<128x128xf32, #tpu.memory_space<vmem>>, vector<8x128xf32>
    tpu.vector_store %arg9[%c80, %c0_23], %20 {strides = array<i32>} : memref<128x128xf32, #tpu.memory_space<vmem>>, vector<8x128xf32>,
    %c0_24 = arith.constant 0 : index
    %c11 = arith.constant 11 : index
    %22 = vector.load %arg1[%c0_24, %c11] : memref<8x256xf32, #tpu.memory_space<vmem>>, vector<8x128xf32>
    %c88 = arith.constant 88 : index
    %c0_25 = arith.constant 0 : index
    %23 = vector.load %arg9[%c88, %c0_25] : memref<128x128xf32, #tpu.memory_space<vmem>>, vector<8x128xf32>
    tpu.vector_store %arg9[%c88, %c0_25], %22 {strides = array<i32>} : memref<128x128xf32, #tpu.memory_space<vmem>>, vector<8x128xf32>,
    %c0_26 = arith.constant 0 : index
    %c12 = arith.constant 12 : index
    %24 = vector.load %arg1[%c0_26, %c12] : memref<8x256xf32, #tpu.memory_space<vmem>>, vector<8x128xf32>
    %c96 = arith.constant 96 : index
    %c0_27 = arith.constant 0 : index
    %25 = vector.load %arg9[%c96, %c0_27] : memref<128x128xf32, #tpu.memory_space<vmem>>, vector<8x128xf32>
    tpu.vector_store %arg9[%c96, %c0_27], %24 {strides = array<i32>} : memref<128x128xf32, #tpu.memory_space<vmem>>, vector<8x128xf32>,
    %c0_28 = arith.constant 0 : index
    %c13 = arith.constant 13 : index
    %26 = vector.load %arg1[%c0_28, %c13] : memref<8x256xf32, #tpu.memory_space<vmem>>, vector<8x128xf32>
    %c104 = arith.constant 104 : index
    %c0_29 = arith.constant 0 : index
    %27 = vector.load %arg9[%c104, %c0_29] : memref<128x128xf32, #tpu.memory_space<vmem>>, vector<8x128xf32>
    tpu.vector_store %arg9[%c104, %c0_29], %26 {strides = array<i32>} : memref<128x128xf32, #tpu.memory_space<vmem>>, vector<8x128xf32>,
    %c0_30 = arith.constant 0 : index
    %c14 = arith.constant 14 : index
    %28 = vector.load %arg1[%c0_30, %c14] : memref<8x256xf32, #tpu.memory_space<vmem>>, vector<8x128xf32>
    %c112 = arith.constant 112 : index
    %c0_31 = arith.constant 0 : index
    %29 = vector.load %arg9[%c112, %c0_31] : memref<128x128xf32, #tpu.memory_space<vmem>>, vector<8x128xf32>
    tpu.vector_store %arg9[%c112, %c0_31], %28 {strides = array<i32>} : memref<128x128xf32, #tpu.memory_space<vmem>>, vector<8x128xf32>,
    %c0_32 = arith.constant 0 : index
    %c15 = arith.constant 15 : index
    %30 = vector.load %arg1[%c0_32, %c15] : memref<8x256xf32, #tpu.memory_space<vmem>>, vector<8x128xf32>
    %c120 = arith.constant 120 : index
    %c0_33 = arith.constant 0 : index
    %31 = vector.load %arg9[%c120, %c0_33] : memref<128x128xf32, #tpu.memory_space<vmem>>, vector<8x128xf32>
    tpu.vector_store %arg9[%c120, %c0_33], %30 {strides = array<i32>} : memref<128x128xf32, #tpu.memory_space<vmem>>, vector<8x128xf32>,
    %c0_34 = arith.constant 0 : index
    %c0_35 = arith.constant 0 : index
    %32 = vector.load %arg2[%c0_34, %c0_35] : memref<16x128xf32, #tpu.memory_space<vmem>>, vector<16x128xf32>
    %c0_36 = arith.constant 0 : index
    %c0_37 = arith.constant 0 : index
    %33 = vector.load %arg9[%c0_36, %c0_37] : memref<128x128xf32, #tpu.memory_space<vmem>>, vector<128x128xf32>
    %cst = arith.constant dense<0.000000e+00> : vector<16x128xf32>
    %34 = tpu.matmul %32, %33, %cst {dimension_numbers = #tpu.dot_dimension_numbers<[1], [0], [0], [1], [0, 0, 1, 1], [], []>} : vector<16x128xf32>, vector<128x128xf32>, vector<16x128xf32> -> vector<16x128xf32>
    %c0_38 = arith.constant 0 : index
    %c0_39 = arith.constant 0 : index
    %35 = vector.load %arg3[%c0_38, %c0_39] : memref<16x1xf32, #tpu.memory_space<vmem>>, vector<16x1xf32>
    %36 = vector.broadcast %35 : vector<16x1xf32> to vector<16x128xf32>
    %37 = arith.addf %34, %36 : vector<16x128xf32>
    %cst_40 = arith.constant 0.000000e+00 : f32
    %38 = vector.broadcast %cst_40 : f32 to vector<16x128xf32>
    %39 = arith.cmpf ogt, %37, %38 : vector<16x128xf32>
    %cst_41 = arith.constant 0.000000e+00 : f32
    %40 = vector.broadcast %cst_41 : f32 to vector<16x128xf32>
    %41 = arith.minimumf %37, %40 : vector<16x128xf32>
    %42 = math.exp %41 : vector<16x128xf32>
    %cst_42 = arith.constant 1.000000e+00 : f32
    %43 = vector.broadcast %cst_42 : f32 to vector<16x128xf32>
    %44 = arith.subf %42, %43 : vector<16x128xf32>
    %45 = arith.select %39, %37, %44 : vector<16x128xi1>, vector<16x128xf32>
    %c0_43 = arith.constant 0 : index
    %c0_44 = arith.constant 0 : index
    %46 = vector.load %arg4[%c0_43, %c0_44] : memref<128x256xf32, #tpu.memory_space<vmem>>, vector<128x256xf32>
    %cst_45 = arith.constant dense<0.000000e+00> : vector<16x256xf32>
    %47 = tpu.matmul %45, %46, %cst_45 {dimension_numbers = #tpu.dot_dimension_numbers<[1], [0], [0], [1], [0, 0, 1, 1], [], []>} : vector<16x128xf32>, vector<128x256xf32>, vector<16x256xf32> -> vector<16x256xf32>
    %48 = vector.extract_strided_slice %47 {offsets = [0, 0], sizes = [16, 128], strides = [1, 1]} : vector<16x256xf32> to vector<16x128xf32>
    %c0_46 = arith.constant 0 : index
    %c0_47 = arith.constant 0 : index
    %49 = vector.load %arg10[%c0_46, %c0_47] : memref<256x128xf32, #tpu.memory_space<vmem>>, vector<16x128xf32>
    tpu.vector_store %arg10[%c0_46, %c0_47], %48 {strides = array<i32>} : memref<256x128xf32, #tpu.memory_space<vmem>>, vector<16x128xf32>,
    %50 = vector.extract_strided_slice %47 {offsets = [0, 1], sizes = [16, 128], strides = [1, 1]} : vector<16x256xf32> to vector<16x128xf32>
    %c16_48 = arith.constant 16 : index
    %c0_49 = arith.constant 0 : index
    %51 = vector.load %arg10[%c16_48, %c0_49] : memref<256x128xf32, #tpu.memory_space<vmem>>, vector<16x128xf32>
    tpu.vector_store %arg10[%c16_48, %c0_49], %50 {strides = array<i32>} : memref<256x128xf32, #tpu.memory_space<vmem>>, vector<16x128xf32>,
    %52 = vector.extract_strided_slice %47 {offsets = [0, 2], sizes = [16, 128], strides = [1, 1]} : vector<16x256xf32> to vector<16x128xf32>
    %c32_50 = arith.constant 32 : index
    %c0_51 = arith.constant 0 : index
    %53 = vector.load %arg10[%c32_50, %c0_51] : memref<256x128xf32, #tpu.memory_space<vmem>>, vector<16x128xf32>
    tpu.vector_store %arg10[%c32_50, %c0_51], %52 {strides = array<i32>} : memref<256x128xf32, #tpu.memory_space<vmem>>, vector<16x128xf32>,
    %54 = vector.extract_strided_slice %47 {offsets = [0, 3], sizes = [16, 128], strides = [1, 1]} : vector<16x256xf32> to vector<16x128xf32>
    %c48_52 = arith.constant 48 : index
    %c0_53 = arith.constant 0 : index
    %55 = vector.load %arg10[%c48_52, %c0_53] : memref<256x128xf32, #tpu.memory_space<vmem>>, vector<16x128xf32>
    tpu.vector_store %arg10[%c48_52, %c0_53], %54 {strides = array<i32>} : memref<256x128xf32, #tpu.memory_space<vmem>>, vector<16x128xf32>,
    %56 = vector.extract_strided_slice %47 {offsets = [0, 4], sizes = [16, 128], strides = [1, 1]} : vector<16x256xf32> to vector<16x128xf32>
    %c64_54 = arith.constant 64 : index
    %c0_55 = arith.constant 0 : index
    %57 = vector.load %arg10[%c64_54, %c0_55] : memref<256x128xf32, #tpu.memory_space<vmem>>, vector<16x128xf32>
    tpu.vector_store %arg10[%c64_54, %c0_55], %56 {strides = array<i32>} : memref<256x128xf32, #tpu.memory_space<vmem>>, vector<16x128xf32>,
    %58 = vector.extract_strided_slice %47 {offsets = [0, 5], sizes = [16, 128], strides = [1, 1]} : vector<16x256xf32> to vector<16x128xf32>
    %c80_56 = arith.constant 80 : index
    %c0_57 = arith.constant 0 : index
    %59 = vector.load %arg10[%c80_56, %c0_57] : memref<256x128xf32, #tpu.memory_space<vmem>>, vector<16x128xf32>
    tpu.vector_store %arg10[%c80_56, %c0_57], %58 {strides = array<i32>} : memref<256x128xf32, #tpu.memory_space<vmem>>, vector<16x128xf32>,
    %60 = vector.extract_strided_slice %47 {offsets = [0, 6], sizes = [16, 128], strides = [1, 1]} : vector<16x256xf32> to vector<16x128xf32>
    %c96_58 = arith.constant 96 : index
    %c0_59 = arith.constant 0 : index
    %61 = vector.load %arg10[%c96_58, %c0_59] : memref<256x128xf32, #tpu.memory_space<vmem>>, vector<16x128xf32>
    tpu.vector_store %arg10[%c96_58, %c0_59], %60 {strides = array<i32>} : memref<256x128xf32, #tpu.memory_space<vmem>>, vector<16x128xf32>,
    %62 = vector.extract_strided_slice %47 {offsets = [0, 7], sizes = [16, 128], strides = [1, 1]} : vector<16x256xf32> to vector<16x128xf32>
    %c112_60 = arith.constant 112 : index
    %c0_61 = arith.constant 0 : index
    %63 = vector.load %arg10[%c112_60, %c0_61] : memref<256x128xf32, #tpu.memory_space<vmem>>, vector<16x128xf32>
    tpu.vector_store %arg10[%c112_60, %c0_61], %62 {strides = array<i32>} : memref<256x128xf32, #tpu.memory_space<vmem>>, vector<16x128xf32>,
    %64 = vector.extract_strided_slice %47 {offsets = [0, 8], sizes = [16, 128], strides = [1, 1]} : vector<16x256xf32> to vector<16x128xf32>
    %c128 = arith.constant 128 : index
    %c0_62 = arith.constant 0 : index
    %65 = vector.load %arg10[%c128, %c0_62] : memref<256x128xf32, #tpu.memory_space<vmem>>, vector<16x128xf32>
    tpu.vector_store %arg10[%c128, %c0_62], %64 {strides = array<i32>} : memref<256x128xf32, #tpu.memory_space<vmem>>, vector<16x128xf32>,
    %66 = vector.extract_strided_slice %47 {offsets = [0, 9], sizes = [16, 128], strides = [1, 1]} : vector<16x256xf32> to vector<16x128xf32>
    %c144 = arith.constant 144 : index
    %c0_63 = arith.constant 0 : index
    %67 = vector.load %arg10[%c144, %c0_63] : memref<256x128xf32, #tpu.memory_space<vmem>>, vector<16x128xf32>
    tpu.vector_store %arg10[%c144, %c0_63], %66 {strides = array<i32>} : memref<256x128xf32, #tpu.memory_space<vmem>>, vector<16x128xf32>,
    %68 = vector.extract_strided_slice %47 {offsets = [0, 10], sizes = [16, 128], strides = [1, 1]} : vector<16x256xf32> to vector<16x128xf32>
    %c160 = arith.constant 160 : index
    %c0_64 = arith.constant 0 : index
    %69 = vector.load %arg10[%c160, %c0_64] : memref<256x128xf32, #tpu.memory_space<vmem>>, vector<16x128xf32>
    tpu.vector_store %arg10[%c160, %c0_64], %68 {strides = array<i32>} : memref<256x128xf32, #tpu.memory_space<vmem>>, vector<16x128xf32>,
    %70 = vector.extract_strided_slice %47 {offsets = [0, 11], sizes = [16, 128], strides = [1, 1]} : vector<16x256xf32> to vector<16x128xf32>
    %c176 = arith.constant 176 : index
    %c0_65 = arith.constant 0 : index
    %71 = vector.load %arg10[%c176, %c0_65] : memref<256x128xf32, #tpu.memory_space<vmem>>, vector<16x128xf32>
    tpu.vector_store %arg10[%c176, %c0_65], %70 {strides = array<i32>} : memref<256x128xf32, #tpu.memory_space<vmem>>, vector<16x128xf32>,
    %72 = vector.extract_strided_slice %47 {offsets = [0, 12], sizes = [16, 128], strides = [1, 1]} : vector<16x256xf32> to vector<16x128xf32>
    %c192 = arith.constant 192 : index
    %c0_66 = arith.constant 0 : index
    %73 = vector.load %arg10[%c192, %c0_66] : memref<256x128xf32, #tpu.memory_space<vmem>>, vector<16x128xf32>
    tpu.vector_store %arg10[%c192, %c0_66], %72 {strides = array<i32>} : memref<256x128xf32, #tpu.memory_space<vmem>>, vector<16x128xf32>,
    %74 = vector.extract_strided_slice %47 {offsets = [0, 13], sizes = [16, 128], strides = [1, 1]} : vector<16x256xf32> to vector<16x128xf32>
    %c208 = arith.constant 208 : index
    %c0_67 = arith.constant 0 : index
    %75 = vector.load %arg10[%c208, %c0_67] : memref<256x128xf32, #tpu.memory_space<vmem>>, vector<16x128xf32>
    tpu.vector_store %arg10[%c208, %c0_67], %74 {strides = array<i32>} : memref<256x128xf32, #tpu.memory_space<vmem>>, vector<16x128xf32>,
    %76 = vector.extract_strided_slice %47 {offsets = [0, 14], sizes = [16, 128], strides = [1, 1]} : vector<16x256xf32> to vector<16x128xf32>
    %c224 = arith.constant 224 : index
    %c0_68 = arith.constant 0 : index
    %77 = vector.load %arg10[%c224, %c0_68] : memref<256x128xf32, #tpu.memory_space<vmem>>, vector<16x128xf32>
    tpu.vector_store %arg10[%c224, %c0_68], %76 {strides = array<i32>} : memref<256x128xf32, #tpu.memory_space<vmem>>, vector<16x128xf32>,
    %78 = vector.extract_strided_slice %47 {offsets = [0, 15], sizes = [16, 128], strides = [1, 1]} : vector<16x256xf32> to vector<16x128xf32>
    %c240 = arith.constant 240 : index
    %c0_69 = arith.constant 0 : index
    %79 = vector.load %arg10[%c240, %c0_69] : memref<256x128xf32, #tpu.memory_space<vmem>>, vector<16x128xf32>
    tpu.vector_store %arg10[%c240, %c0_69], %78 {strides = array<i32>} : memref<256x128xf32, #tpu.memory_space<vmem>>, vector<16x128xf32>,
    %c0_70 = arith.constant 0 : index
    %c0_71 = arith.constant 0 : index
    %80 = vector.load %arg5[%c0_70, %c0_71] : memref<16x256xf32, #tpu.memory_space<vmem>>, vector<16x256xf32>
    %c0_72 = arith.constant 0 : index
    %c0_73 = arith.constant 0 : index
    %81 = vector.load %arg10[%c0_72, %c0_73] : memref<256x128xf32, #tpu.memory_space<vmem>>, vector<256x128xf32>
    %cst_74 = arith.constant dense<0.000000e+00> : vector<16x128xf32>
    %82 = tpu.matmul %80, %81, %cst_74 {dimension_numbers = #tpu.dot_dimension_numbers<[1], [0], [0], [1], [0, 0, 1, 1], [], []>} : vector<16x256xf32>, vector<256x128xf32>, vector<16x128xf32> -> vector<16x128xf32>
    %c0_75 = arith.constant 0 : index
    %c0_76 = arith.constant 0 : index
    %83 = vector.load %arg6[%c0_75, %c0_76] : memref<16x1xf32, #tpu.memory_space<vmem>>, vector<16x1xf32>
    %84 = vector.broadcast %83 : vector<16x1xf32> to vector<16x128xf32>
    %85 = arith.addf %82, %84 : vector<16x128xf32>
    %cst_77 = arith.constant 0.000000e+00 : f32
    %86 = vector.broadcast %cst_77 : f32 to vector<16x128xf32>
    %87 = arith.cmpf ogt, %85, %86 : vector<16x128xf32>
    %cst_78 = arith.constant 0.000000e+00 : f32
    %88 = vector.broadcast %cst_78 : f32 to vector<16x128xf32>
    %89 = arith.minimumf %85, %88 : vector<16x128xf32>
    %90 = math.exp %89 : vector<16x128xf32>
    %cst_79 = arith.constant 1.000000e+00 : f32
    %91 = vector.broadcast %cst_79 : f32 to vector<16x128xf32>
    %92 = arith.subf %90, %91 : vector<16x128xf32>
    %93 = arith.select %87, %85, %92 : vector<16x128xi1>, vector<16x128xf32>
    %c0_80 = arith.constant 0 : index
    %c0_81 = arith.constant 0 : index
    %94 = vector.load %arg7[%c0_80, %c0_81] : memref<128x2xf32, #tpu.memory_space<vmem>>, vector<128x2xf32>
    %cst_82 = arith.constant dense<0.000000e+00> : vector<16x2xf32>
    %95 = tpu.matmul %93, %94, %cst_82 {dimension_numbers = #tpu.dot_dimension_numbers<[1], [0], [0], [1], [0, 0, 1, 1], [], []>} : vector<16x128xf32>, vector<128x2xf32>, vector<16x2xf32> -> vector<16x2xf32>
    %c0_83 = arith.constant 0 : index
    %c0_84 = arith.constant 0 : index
    %96 = vector.load %arg8[%c0_83, %c0_84] : memref<16x2xf32, #tpu.memory_space<vmem>>, vector<16x2xf32>
    tpu.vector_store %arg8[%c0_83, %c0_84], %95 {strides = array<i32>} : memref<16x2xf32, #tpu.memory_space<vmem>>, vector<16x2xf32>,
    return
  }
  func.func @transform_0(%arg0: i32) -> (i32, i32) {
    %c0_i32 = arith.constant 0 : i32
    %c0_i32_0 = arith.constant 0 : i32
    %c0_i32_1 = arith.constant 0 : i32
    return %c0_i32, %c0_i32_0 : i32, i32
  }
  func.func @transform_1(%arg0: i32) -> (i32, i32) {
    %c0_i32 = arith.constant 0 : i32
    %c0_i32_0 = arith.constant 0 : i32
    %c0_i32_1 = arith.constant 0 : i32
    return %c0_i32, %c0_i32_0 : i32, i32
  }
  func.func @transform_2(%arg0: i32) -> (i32, i32) {
    %c0_i32 = arith.constant 0 : i32
    %c0_i32_0 = arith.constant 0 : i32
    %c0_i32_1 = arith.constant 0 : i32
    return %c0_i32, %c0_i32_0 : i32, i32
  }
  func.func @transform_3(%arg0: i32) -> (i32, i32) {
    %c0_i32 = arith.constant 0 : i32
    %c0_i32_0 = arith.constant 0 : i32
    %c0_i32_1 = arith.constant 0 : i32
    return %c0_i32, %c0_i32_0 : i32, i32
  }
  func.func @transform_4(%arg0: i32) -> (i32, i32) {
    %c0_i32 = arith.constant 0 : i32
    %c0_i32_0 = arith.constant 0 : i32
    %c0_i32_1 = arith.constant 0 : i32
    return %c0_i32, %c0_i32_0 : i32, i32
  }
  func.func @transform_5(%arg0: i32) -> (i32, i32) {
    %c0_i32 = arith.constant 0 : i32
    %c0_i32_0 = arith.constant 0 : i32
    %c0_i32_1 = arith.constant 0 : i32
    return %c0_i32, %c0_i32_0 : i32, i32
  }
  func.func @transform_6(%arg0: i32) -> (i32, i32) {
    %c0_i32 = arith.constant 0 : i32
    %c0_i32_0 = arith.constant 0 : i32
    %c0_i32_1 = arith.constant 0 : i32
    return %c0_i32, %c0_i32_0 : i32, i32
  }
  func.func @transform_7(%arg0: i32) -> (i32, i32) {
    %c0_i32 = arith.constant 0 : i32
    %c0_i32_0 = arith.constant 0 : i32
    %c0_i32_1 = arith.constant 0 : i32
    return %c0_i32, %c0_i32_0 : i32, i32
  }
}

</mosaic_0001>

<llo_original>
// kernel: eegnet_forward.1
$region0: #{eegnet_forward.1}
  #allocation0 [shape = 'u32[]', space=smem, size = 0x4, offset = 0x4, fixed_abs, tag = 'smem constant byte address 0x4 - core index']
  #allocation1 [shape = 'u32[72,128]{1,0:T(1,128)}', space=vmem, size = 0x9000, scoped, tag = 'internal scratch']
  #allocation2 [shape = 'f32[128,128]{1,0:T(8,128)}', space=vmem, size = 0x10000, scoped, tag = 'scratch operand']
  #allocation3 [shape = 'f32[256,128]{1,0:T(8,128)}', space=vmem, size = 0x20000, scoped, tag = 'scratch operand']
  %s0 = inlined_call_operand.vmem [shape: f32[8,256], index: 0, kind: input, shape index: {}]
  %s1 = inlined_call_operand.vmem [shape: f32[16,128], index: 1, kind: input, shape index: {}]
  %s2 = inlined_call_operand.vmem [shape: f32[16,1], index: 2, kind: input, shape index: {}]
  %s3 = inlined_call_operand.hbm [shape: f32[128,256], index: 3, kind: input, shape index: {}]
  %s4 = inlined_call_operand.vmem [shape: f32[16,256], index: 4, kind: input, shape index: {}]
  %s5 = inlined_call_operand.vmem [shape: f32[16,1], index: 5, kind: input, shape index: {}]
  %s6 = inlined_call_operand.vmem [shape: f32[128,2], index: 6, kind: input, shape index: {}]
  %s7 = inlined_call_operand.vmem [shape: f32[16,2], index: 7, kind: output, shape index: {}]
  %s8 = sld [smem:[#allocation0]]
  $region42: #{eegnet_forward.1} parent=0
    _
  %s10 = ssub.s32 1, %s8
  %s11 = scalar_select 0, %s10, %s8
  $region1: #{eegnet_forward.1} parent=0
    #allocation4 [shape = 'u8[131072]{0}', space=vmem, size = 0x20000, scoped, tag = 'input window, operand 3, single buffered']
    #allocation5 [shape = 's32[1]{0}', space=sflag, size = 0x4, scoped, tag = 'scoped memory for eegnet_forward.1']
    %12 = vsyncpa [#allocation5], 0
    // Predicated region
    $region2: #{eegnet_forward.1} parent=1 // pred_check
      _
    $region3: #{eegnet_forward.1} parent=1 // pred_check_branch
      %14 = sbr.rel (0) target = $region5
    $region4: #{eegnet_forward.1} parent=1 // pred_region
      _
    $region5: #{eegnet_forward.1} parent=1 // pred_fallthru
      _
    // Predicated region
    $region6: #{eegnet_forward.1} parent=1 // pred_check
      _
    $region7: #{eegnet_forward.1} parent=1 // pred_check_branch
      %16 = sbr.rel (0) target = $region9
    $region8: #{eegnet_forward.1} parent=1 // pred_region
      _
    $region9: #{eegnet_forward.1} parent=1 // pred_fallthru
      _
    // Predicated region
    $region10: #{eegnet_forward.1} parent=1 // pred_check
      _
    $region11: #{eegnet_forward.1} parent=1 // pred_check_branch
      %18 = sbr.rel (0) target = $region13
    $region12: #{eegnet_forward.1} parent=1 // pred_region
      _
    $region13: #{eegnet_forward.1} parent=1 // pred_fallthru
      _
    // Predicated region
    $region14: #{eegnet_forward.1} parent=1 // pred_check
      _
    $region15: #{eegnet_forward.1} parent=1 // pred_check_branch
      %20 = sbr.rel (0) target = $region17
    $region16: #{eegnet_forward.1} parent=1 // pred_region
      %22 = vsyncadd [#allocation5], 0
      %s23 = sshll.u32 %s3, 4
      %s24 = int_to_ptr.hbm [resolvable:$true] %s23
      %s25 = sshll.u32 [#allocation4], 4
      %s26 = int_to_ptr.vmem [resolvable:$true] %s25
      %31 = dma.hbm_to_vmem [thread:$0]  %s24, 4096, %s26, [#allocation5], 256, 256, 16
    $region17: #{eegnet_forward.1} parent=1 // pred_fallthru
      _
    // Predicated region
    $region18: #{eegnet_forward.1} parent=1 // pred_check
      _
    $region19: #{eegnet_forward.1} parent=1 // pred_check_branch
      %33 = sbr.rel (0) target = $region21
    $region20: #{eegnet_forward.1} parent=1 // pred_region
      _
    $region21: #{eegnet_forward.1} parent=1 // pred_fallthru
      _
    // Predicated region
    $region22: #{eegnet_forward.1} parent=1 // pred_check
      _
    $region23: #{eegnet_forward.1} parent=1 // pred_check_branch
      %35 = sbr.rel (0) target = $region25
    $region24: #{eegnet_forward.1} parent=1 // pred_region
      _
    $region25: #{eegnet_forward.1} parent=1 // pred_fallthru
      _
    // Predicated region
    $region26: #{eegnet_forward.1} parent=1 // pred_check
      _
    $region27: #{eegnet_forward.1} parent=1 // pred_check_branch
      %37 = sbr.rel (0) target = $region29
    $region28: #{eegnet_forward.1} parent=1 // pred_region
      _
    $region29: #{eegnet_forward.1} parent=1 // pred_fallthru
      _
    // Predicated region
    $region30: #{eegnet_forward.1} parent=1 // pred_check
      _
    $region31: #{eegnet_forward.1} parent=1 // pred_check_branch
      %39 = sbr.rel (0) target = $region33
    $region32: #{eegnet_forward.1} parent=1 // pred_region
      %41 = dma.done [#allocation5], 4096
    $region33: #{eegnet_forward.1} parent=1 // pred_fallthru
      _
    %v42 = vld [vmem:[%s0] sm:$0xff]
    %43 = vst [vmem:[#allocation2] sm:$0xff] %v42
    %v44 = vld [vmem:[%s0] sm:$0xff]
    %v45 = vld [vmem:[%s0 + $0x8] sm:$0xff]
    %48 = vrot.lane.b32.xlu0 %v44, 127
    %v49 = vpop.permute.xlu0 %48
    %50 = vrot.lane.b32.xlu0 %v45, 127
    %v51 = vpop.permute.xlu0 %50
    %vm52 = vcmask 1039360
    %v53 = vsel %vm52, %v49, %v51
    %55 = vst [vmem:[#allocation2 + $0x8] sm:$0xff] %v53
    %v56 = vld [vmem:[%s0] sm:$0xff]
    %v57 = vld [vmem:[%s0 + $0x8] sm:$0xff]
    %60 = vrot.lane.b32.xlu0 %v56, 126
    %v61 = vpop.permute.xlu0 %60
    %62 = vrot.lane.b32.xlu0 %v57, 126
    %v63 = vpop.permute.xlu0 %62
    %vm64 = vcmask 1031168
    %v65 = vsel %vm64, %v61, %v63
    %67 = vst [vmem:[#allocation2 + $0x10] sm:$0xff] %v65
    %v68 = vld [vmem:[%s0] sm:$0xff]
    %v69 = vld [vmem:[%s0 + $0x8] sm:$0xff]
    %72 = vrot.lane.b32.xlu0 %v68, 125
    %v73 = vpop.permute.xlu0 %72
    %74 = vrot.lane.b32.xlu0 %v69, 125
    %v75 = vpop.permute.xlu0 %74
    %vm76 = vcmask 1022976
    %v77 = vsel %vm76, %v73, %v75
    %79 = vst [vmem:[#allocation2 + $0x18] sm:$0xff] %v77
    %v80 = vld [vmem:[%s0] sm:$0xff]
    %v81 = vld [vmem:[%s0 + $0x8] sm:$0xff]
    %84 = vrot.lane.b32.xlu0 %v80, 124
    %v85 = vpop.permute.xlu0 %84
    %86 = vrot.lane.b32.xlu0 %v81, 124
    %v87 = vpop.permute.xlu0 %86
    %vm88 = vcmask 1014784
    %v89 = vsel %vm88, %v85, %v87
    %91 = vst [vmem:[#allocation2 + $0x20] sm:$0xff] %v89
    %v92 = vld [vmem:[%s0] sm:$0xff]
    %v93 = vld [vmem:[%s0 + $0x8] sm:$0xff]
    %96 = vrot.lane.b32.xlu0 %v92, 123
    %v97 = vpop.permute.xlu0 %96
    %98 = vrot.lane.b32.xlu0 %v93, 123
    %v99 = vpop.permute.xlu0 %98
    %vm100 = vcmask 1006592
    %v101 = vsel %vm100, %v97, %v99
    %103 = vst [vmem:[#allocation2 + $0x28] sm:$0xff] %v101
    %v104 = vld [vmem:[%s0] sm:$0xff]
    %v105 = vld [vmem:[%s0 + $0x8] sm:$0xff]
    %108 = vrot.lane.b32.xlu0 %v104, 122
    %v109 = vpop.permute.xlu0 %108
    %110 = vrot.lane.b32.xlu0 %v105, 122
    %v111 = vpop.permute.xlu0 %110
    %vm112 = vcmask 998400
    %v113 = vsel %vm112, %v109, %v111
    %115 = vst [vmem:[#allocation2 + $0x30] sm:$0xff] %v113
    %v116 = vld [vmem:[%s0] sm:$0xff]
    %v117 = vld [vmem:[%s0 + $0x8] sm:$0xff]
    %120 = vrot.lane.b32.xlu0 %v116, 121
    %v121 = vpop.permute.xlu0 %120
    %122 = vrot.lane.b32.xlu0 %v117, 121
    %v123 = vpop.permute.xlu0 %122
    %vm124 = vcmask 990208
    %v125 = vsel %vm124, %v121, %v123
    %127 = vst [vmem:[#allocation2 + $0x38] sm:$0xff] %v125
    %v128 = vld [vmem:[%s0] sm:$0xff]
    %v129 = vld [vmem:[%s0 + $0x8] sm:$0xff]
    %132 = vrot.lane.b32.xlu0 %v128, 120
    %v133 = vpop.permute.xlu0 %132
    %134 = vrot.lane.b32.xlu0 %v129, 120
    %v135 = vpop.permute.xlu0 %134
    %vm136 = vcmask 982016
    %v137 = vsel %vm136, %v133, %v135
    %139 = vst [vmem:[#allocation2 + $0x40] sm:$0xff] %v137
    %v140 = vld [vmem:[%s0] sm:$0xff]
    %v141 = vld [vmem:[%s0 + $0x8] sm:$0xff]
    %144 = vrot.lane.b32.xlu0 %v140, 119
    %v145 = vpop.permute.xlu0 %144
    %146 = vrot.lane.b32.xlu0 %v141, 119
    %v147 = vpop.permute.xlu0 %146
    %vm148 = vcmask 973824
    %v149 = vsel %vm148, %v145, %v147
    %151 = vst [vmem:[#allocation2 + $0x48] sm:$0xff] %v149
    %v152 = vld [vmem:[%s0] sm:$0xff]
    %v153 = vld [vmem:[%s0 + $0x8] sm:$0xff]
    %156 = vrot.lane.b32.xlu0 %v152, 118
    %v157 = vpop.permute.xlu0 %156
    %158 = vrot.lane.b32.xlu0 %v153, 118
    %v159 = vpop.permute.xlu0 %158
    %vm160 = vcmask 965632
    %v161 = vsel %vm160, %v157, %v159
    %163 = vst [vmem:[#allocation2 + $0x50] sm:$0xff] %v161
    %v164 = vld [vmem:[%s0] sm:$0xff]
    %v165 = vld [vmem:[%s0 + $0x8] sm:$0xff]
    %168 = vrot.lane.b32.xlu0 %v164, 117
    %v169 = vpop.permute.xlu0 %168
    %170 = vrot.lane.b32.xlu0 %v165, 117
    %v171 = vpop.permute.xlu0 %170
    %vm172 = vcmask 957440
    %v173 = vsel %vm172, %v169, %v171
    %175 = vst [vmem:[#allocation2 + $0x58] sm:$0xff] %v173
    %v176 = vld [vmem:[%s0] sm:$0xff]
    %v177 = vld [vmem:[%s0 + $0x8] sm:$0xff]
    %180 = vrot.lane.b32.xlu0 %v176, 116
    %v181 = vpop.permute.xlu0 %180
    %182 = vrot.lane.b32.xlu0 %v177, 116
    %v183 = vpop.permute.xlu0 %182
    %vm184 = vcmask 949248
    %v185 = vsel %vm184, %v181, %v183
    %187 = vst [vmem:[#allocation2 + $0x60] sm:$0xff] %v185
    %v188 = vld [vmem:[%s0] sm:$0xff]
    %v189 = vld [vmem:[%s0 + $0x8] sm:$0xff]
    %192 = vrot.lane.b32.xlu0 %v188, 115
    %v193 = vpop.permute.xlu0 %192
    %194 = vrot.lane.b32.xlu0 %v189, 115
    %v195 = vpop.permute.xlu0 %194
    %vm196 = vcmask 941056
    %v197 = vsel %vm196, %v193, %v195
    %199 = vst [vmem:[#allocation2 + $0x68] sm:$0xff] %v197
    %v200 = vld [vmem:[%s0] sm:$0xff]
    %v201 = vld [vmem:[%s0 + $0x8] sm:$0xff]
    %204 = vrot.lane.b32.xlu0 %v200, 114
    %v205 = vpop.permute.xlu0 %204
    %206 = vrot.lane.b32.xlu0 %v201, 114
    %v207 = vpop.permute.xlu0 %206
    %vm208 = vcmask 932864
    %v209 = vsel %vm208, %v205, %v207
    %211 = vst [vmem:[#allocation2 + $0x70] sm:$0xff] %v209
    %v212 = vld [vmem:[%s0] sm:$0xff]
    %v213 = vld [vmem:[%s0 + $0x8] sm:$0xff]
    %216 = vrot.lane.b32.xlu0 %v212, 113
    %v217 = vpop.permute.xlu0 %216
    %218 = vrot.lane.b32.xlu0 %v213, 113
    %v219 = vpop.permute.xlu0 %218
    %vm220 = vcmask 924672
    %v221 = vsel %vm220, %v217, %v219
    %223 = vst [vmem:[#allocation2 + $0x78] sm:$0xff] %v221
    %v224 = vld [vmem:[%s1] sm:$0xff]
    %v225 = vld [vmem:[%s1 + $0x8] sm:$0xff]
    %v226 = vld [vmem:[#allocation2] sm:$0xff]
    %v227 = vld [vmem:[#allocation2 + $0x8] sm:$0xff]
    %v228 = vld [vmem:[#allocation2 + $0x10] sm:$0xff]
    %v229 = vld [vmem:[#allocation2 + $0x18] sm:$0xff]
    %v230 = vld [vmem:[#allocation2 + $0x20] sm:$0xff]
    %v231 = vld [vmem:[#allocation2 + $0x28] sm:$0xff]
    %v232 = vld [vmem:[#allocation2 + $0x30] sm:$0xff]
    %v233 = vld [vmem:[#allocation2 + $0x38] sm:$0xff]
    %v234 = vld [vmem:[#allocation2 + $0x40] sm:$0xff]
    %v235 = vld [vmem:[#allocation2 + $0x48] sm:$0xff]
    %v236 = vld [vmem:[#allocation2 + $0x50] sm:$0xff]
    %v237 = vld [vmem:[#allocation2 + $0x58] sm:$0xff]
    %v238 = vld [vmem:[#allocation2 + $0x60] sm:$0xff]
    %v239 = vld [vmem:[#allocation2 + $0x68] sm:$0xff]
    %v240 = vld [vmem:[#allocation2 + $0x70] sm:$0xff]
    %v241 = vld [vmem:[#allocation2 + $0x78] sm:$0xff]
    %v242 = vld [vmem:[%s2] sm:$0xff]
    %v243 = vld [vmem:[%s2 + $0x8] sm:$0xff]
    %245 = vset.pattern.permute.xlu0 0
    %246 = vperm.xlu0 %245, %v242
    %v247 = vpop.permute.xlu0 %246
    %250 = vset.pattern.permute.xlu0 0
    %251 = vperm.xlu0 %250, %v243
    %v252 = vpop.permute.xlu0 %251
    %254 = vmatpush.msra.mxu0 %v241
    %255 = vmatpush.msra.mxu0 %v240
    %256 = vmatpush.msra.mxu0 %v239
    %257 = vmatpush.msra.mxu0 %v238
    %258 = vmatpush.msra.mxu0 %v237
    %259 = vmatpush.msra.mxu0 %v236
    %260 = vmatpush.msra.mxu0 %v235
    %261 = vmatpush.msra.mxu0 %v234
    %262 = vmatpush.msra.mxu0 %v233
    %263 = vmatpush.msra.mxu0 %v232
    %264 = vmatpush.msra.mxu0 %v231
    %265 = vmatpush.msra.mxu0 %v230
    %266 = vmatpush.msra.mxu0 %v229
    %267 = vmatpush.msra.mxu0 %v228
    %268 = vmatpush.msra.mxu0 %v227
    %269 = vmatpush.msra.mxu0 %v226
    %270 = vmatmul.f32.gmra.mxu0 %v224
    %v271 = vpop.f32.mrf.mxu0
    %v272 = vadd.f32 %v247, %v271
    %273 = vmatmul.f32.gmra.mxu0 %v225
    %v274 = vpop.f32.mrf.mxu0
    %v275 = vadd.f32 %v252, %v274
    %276 = vdwg.mxu0
    %vm277 = vcmp.gt.f32.partialorder %v272, 0.0
    %vm278 = vcmp.gt.f32.partialorder %v275, 0.0
    %v279 = vmin.f32 %v272, 0.0
    %v280 = vmin.f32 %v275, 0.0
    %v281 = vmul.f32 %v279, 1.442695
    %v282 = vpow.pop %v281
    %v283 = vmul.f32 %v280, 1.442695
    %v284 = vpow.pop %v283
    %v285 = vsub.f32 %v282, 1.0
    %v286 = vsub.f32 %v284, 1.0
    %v287 = vsel %vm277, %v272, %v285
    %v288 = vsel %vm278, %v275, %v286
    %v289 = vld [vmem:[#allocation4] sm:$0xff]
    %v290 = vld [vmem:[#allocation4 + $0x8] sm:$0xff]
    %v291 = vld [vmem:[#allocation4 + $0x10] sm:$0xff]
    %v292 = vld [vmem:[#allocation4 + $0x18] sm:$0xff]
    %v293 = vld [vmem:[#allocation4 + $0x20] sm:$0xff]
    %v294 = vld [vmem:[#allocation4 + $0x28] sm:$0xff]
    %v295 = vld [vmem:[#allocation4 + $0x30] sm:$0xff]
    %v296 = vld [vmem:[#allocation4 + $0x38] sm:$0xff]
    %v297 = vld [vmem:[#allocation4 + $0x40] sm:$0xff]
    %v298 = vld [vmem:[#allocation4 + $0x48] sm:$0xff]
    %v299 = vld [vmem:[#allocation4 + $0x50] sm:$0xff]
    %v300 = vld [vmem:[#allocation4 + $0x58] sm:$0xff]
    %v301 = vld [vmem:[#allocation4 + $0x60] sm:$0xff]
    %v302 = vld [vmem:[#allocation4 + $0x68] sm:$0xff]
    %v303 = vld [vmem:[#allocation4 + $0x70] sm:$0xff]
    %v304 = vld [vmem:[#allocation4 + $0x78] sm:$0xff]
    %v305 = vld [vmem:[#allocation4 + $0x80] sm:$0xff]
    %v306 = vld [vmem:[#allocation4 + $0x88] sm:$0xff]
    %v307 = vld [vmem:[#allocation4 + $0x90] sm:$0xff]
    %v308 = vld [vmem:[#allocation4 + $0x98] sm:$0xff]
    %v309 = vld [vmem:[#allocation4 + $0xa0] sm:$0xff]
    %v310 = vld [vmem:[#allocation4 + $0xa8] sm:$0xff]
    %v311 = vld [vmem:[#allocation4 + $0xb0] sm:$0xff]
    %v312 = vld [vmem:[#allocation4 + $0xb8] sm:$0xff]
    %v313 = vld [vmem:[#allocation4 + $0xc0] sm:$0xff]
    %v314 = vld [vmem:[#allocation4 + $0xc8] sm:$0xff]
    %v315 = vld [vmem:[#allocation4 + $0xd0] sm:$0xff]
    %v316 = vld [vmem:[#allocation4 + $0xd8] sm:$0xff]
    %v317 = vld [vmem:[#allocation4 + $0xe0] sm:$0xff]
    %v318 = vld [vmem:[#allocation4 + $0xe8] sm:$0xff]
    %v319 = vld [vmem:[#allocation4 + $0xf0] sm:$0xff]
    %v320 = vld [vmem:[#allocation4 + $0xf8] sm:$0xff]
    %321 = vmatpush.msra.mxu0 %v319
    %322 = vmatpush.msra.mxu0 %v317
    %323 = vmatpush.msra.mxu0 %v315
    %324 = vmatpush.msra.mxu0 %v313
    %325 = vmatpush.msra.mxu0 %v311
    %326 = vmatpush.msra.mxu0 %v309
    %327 = vmatpush.msra.mxu0 %v307
    %328 = vmatpush.msra.mxu0 %v305
    %329 = vmatpush.msra.mxu0 %v303
    %330 = vmatpush.msra.mxu0 %v301
    %331 = vmatpush.msra.mxu0 %v299
    %332 = vmatpush.msra.mxu0 %v297
    %333 = vmatpush.msra.mxu0 %v295
    %334 = vmatpush.msra.mxu0 %v293
    %335 = vmatpush.msra.mxu0 %v291
    %336 = vmatpush.msra.mxu0 %v289
    %337 = vmatmul.f32.gmra.mxu0 %v287
    %v338 = vpop.f32.mrf.mxu0
    %v339 = vadd.f32 0.0, %v338
    %340 = vmatmul.f32.gmra.mxu0 %v288
    %v341 = vpop.f32.mrf.mxu0
    %v342 = vadd.f32 0.0, %v341
    %343 = vdwg.mxu0
    %344 = vmatpush.msra.mxu0 %v320
    %345 = vmatpush.msra.mxu0 %v318
    %346 = vmatpush.msra.mxu0 %v316
    %347 = vmatpush.msra.mxu0 %v314
    %348 = vmatpush.msra.mxu0 %v312
    %349 = vmatpush.msra.mxu0 %v310
    %350 = vmatpush.msra.mxu0 %v308
    %351 = vmatpush.msra.mxu0 %v306
    %352 = vmatpush.msra.mxu0 %v304
    %353 = vmatpush.msra.mxu0 %v302
    %354 = vmatpush.msra.mxu0 %v300
    %355 = vmatpush.msra.mxu0 %v298
    %356 = vmatpush.msra.mxu0 %v296
    %357 = vmatpush.msra.mxu0 %v294
    %358 = vmatpush.msra.mxu0 %v292
    %359 = vmatpush.msra.mxu0 %v290
    %360 = vmatmul.f32.gmra.mxu0 %v287
    %v361 = vpop.f32.mrf.mxu0
    %v362 = vadd.f32 0.0, %v361
    %363 = vmatmul.f32.gmra.mxu0 %v288
    %v364 = vpop.f32.mrf.mxu0
    %v365 = vadd.f32 0.0, %v364
    %366 = vdwg.mxu0
    %367 = vst [vmem:[#allocation3] sm:$0xff] %v339
    %368 = vst [vmem:[#allocation3 + $0x8] sm:$0xff] %v342
    %373 = vrot.lane.b32.xlu0 %v339, 127
    %v374 = vpop.permute.xlu0 %373
    %375 = vrot.lane.b32.xlu0 %v362, 127
    %v376 = vpop.permute.xlu0 %375
    %377 = vrot.lane.b32.xlu0 %v342, 127
    %v378 = vpop.permute.xlu0 %377
    %379 = vrot.lane.b32.xlu0 %v365, 127
    %v380 = vpop.permute.xlu0 %379
    %v381 = vsel %vm52, %v374, %v376
    %v382 = vsel %vm52, %v378, %v380
    %385 = vst [vmem:[#allocation3 + $0x10] sm:$0xff] %v381
    %386 = vst [vmem:[#allocation3 + $0x18] sm:$0xff] %v382
    %387 = vrot.lane.b32.xlu0 %v339, 126
    %v388 = vpop.permute.xlu0 %387
    %389 = vrot.lane.b32.xlu0 %v362, 126
    %v390 = vpop.permute.xlu0 %389
    %391 = vrot.lane.b32.xlu0 %v342, 126
    %v392 = vpop.permute.xlu0 %391
    %393 = vrot.lane.b32.xlu0 %v365, 126
    %v394 = vpop.permute.xlu0 %393
    %v395 = vsel %vm64, %v388, %v390
    %v396 = vsel %vm64, %v392, %v394
    %399 = vst [vmem:[#allocation3 + $0x20] sm:$0xff] %v395
    %400 = vst [vmem:[#allocation3 + $0x28] sm:$0xff] %v396
    %401 = vrot.lane.b32.xlu0 %v339, 125
    %v402 = vpop.permute.xlu0 %401
    %403 = vrot.lane.b32.xlu0 %v362, 125
    %v404 = vpop.permute.xlu0 %403
    %405 = vrot.lane.b32.xlu0 %v342, 125
    %v406 = vpop.permute.xlu0 %405
    %407 = vrot.lane.b32.xlu0 %v365, 125
    %v408 = vpop.permute.xlu0 %407
    %v409 = vsel %vm76, %v402, %v404
    %v410 = vsel %vm76, %v406, %v408
    %413 = vst [vmem:[#allocation3 + $0x30] sm:$0xff] %v409
    %414 = vst [vmem:[#allocation3 + $0x38] sm:$0xff] %v410
    %415 = vrot.lane.b32.xlu0 %v339, 124
    %v416 = vpop.permute.xlu0 %415
    %417 = vrot.lane.b32.xlu0 %v362, 124
    %v418 = vpop.permute.xlu0 %417
    %419 = vrot.lane.b32.xlu0 %v342, 124
    %v420 = vpop.permute.xlu0 %419
    %421 = vrot.lane.b32.xlu0 %v365, 124
    %v422 = vpop.permute.xlu0 %421
    %v423 = vsel %vm88, %v416, %v418
    %v424 = vsel %vm88, %v420, %v422
    %427 = vst [vmem:[#allocation3 + $0x40] sm:$0xff] %v423
    %428 = vst [vmem:[#allocation3 + $0x48] sm:$0xff] %v424
    %429 = vrot.lane.b32.xlu0 %v339, 123
    %v430 = vpop.permute.xlu0 %429
    %431 = vrot.lane.b32.xlu0 %v362, 123
    %v432 = vpop.permute.xlu0 %431
    %433 = vrot.lane.b32.xlu0 %v342, 123
    %v434 = vpop.permute.xlu0 %433
    %435 = vrot.lane.b32.xlu0 %v365, 123
    %v436 = vpop.permute.xlu0 %435
    %v437 = vsel %vm100, %v430, %v432
    %v438 = vsel %vm100, %v434, %v436
    %441 = vst [vmem:[#allocation3 + $0x50] sm:$0xff] %v437
    %442 = vst [vmem:[#allocation3 + $0x58] sm:$0xff] %v438
    %443 = vrot.lane.b32.xlu0 %v339, 122
    %v444 = vpop.permute.xlu0 %443
    %445 = vrot.lane.b32.xlu0 %v362, 122
    %v446 = vpop.permute.xlu0 %445
    %447 = vrot.lane.b32.xlu0 %v342, 122
    %v448 = vpop.permute.xlu0 %447
    %449 = vrot.lane.b32.xlu0 %v365, 122
    %v450 = vpop.permute.xlu0 %449
    %v451 = vsel %vm112, %v444, %v446
    %v452 = vsel %vm112, %v448, %v450
    %455 = vst [vmem:[#allocation3 + $0x60] sm:$0xff] %v451
    %456 = vst [vmem:[#allocation3 + $0x68] sm:$0xff] %v452
    %457 = vrot.lane.b32.xlu0 %v339, 121
    %v458 = vpop.permute.xlu0 %457
    %459 = vrot.lane.b32.xlu0 %v362, 121
    %v460 = vpop.permute.xlu0 %459
    %461 = vrot.lane.b32.xlu0 %v342, 121
    %v462 = vpop.permute.xlu0 %461
    %463 = vrot.lane.b32.xlu0 %v365, 121
    %v464 = vpop.permute.xlu0 %463
    %v465 = vsel %vm124, %v458, %v460
    %v466 = vsel %vm124, %v462, %v464
    %469 = vst [vmem:[#allocation3 + $0x70] sm:$0xff] %v465
    %470 = vst [vmem:[#allocation3 + $0x78] sm:$0xff] %v466
    %471 = vrot.lane.b32.xlu0 %v339, 120
    %v472 = vpop.permute.xlu0 %471
    %473 = vrot.lane.b32.xlu0 %v362, 120
    %v474 = vpop.permute.xlu0 %473
    %475 = vrot.lane.b32.xlu0 %v342, 120
    %v476 = vpop.permute.xlu0 %475
    %477 = vrot.lane.b32.xlu0 %v365, 120
    %v478 = vpop.permute.xlu0 %477
    %v479 = vsel %vm136, %v472, %v474
    %v480 = vsel %vm136, %v476, %v478
    %483 = vst [vmem:[#allocation3 + $0x80] sm:$0xff] %v479
    %484 = vst [vmem:[#allocation3 + $0x88] sm:$0xff] %v480
    %485 = vrot.lane.b32.xlu0 %v339, 119
    %v486 = vpop.permute.xlu0 %485
    %487 = vrot.lane.b32.xlu0 %v362, 119
    %v488 = vpop.permute.xlu0 %487
    %489 = vrot.lane.b32.xlu0 %v342, 119
    %v490 = vpop.permute.xlu0 %489
    %491 = vrot.lane.b32.xlu0 %v365, 119
    %v492 = vpop.permute.xlu0 %491
    %v493 = vsel %vm148, %v486, %v488
    %v494 = vsel %vm148, %v490, %v492
    %497 = vst [vmem:[#allocation3 + $0x90] sm:$0xff] %v493
    %498 = vst [vmem:[#allocation3 + $0x98] sm:$0xff] %v494
    %499 = vrot.lane.b32.xlu0 %v339, 118
    %v500 = vpop.permute.xlu0 %499
    %501 = vrot.lane.b32.xlu0 %v362, 118
    %v502 = vpop.permute.xlu0 %501
    %503 = vrot.lane.b32.xlu0 %v342, 118
    %v504 = vpop.permute.xlu0 %503
    %505 = vrot.lane.b32.xlu0 %v365, 118
    %v506 = vpop.permute.xlu0 %505
    %v507 = vsel %vm160, %v500, %v502
    %v508 = vsel %vm160, %v504, %v506
    %511 = vst [vmem:[#allocation3 + $0xa0] sm:$0xff] %v507
    %512 = vst [vmem:[#allocation3 + $0xa8] sm:$0xff] %v508
    %513 = vrot.lane.b32.xlu0 %v339, 117
    %v514 = vpop.permute.xlu0 %513
    %515 = vrot.lane.b32.xlu0 %v362, 117
    %v516 = vpop.permute.xlu0 %515
    %517 = vrot.lane.b32.xlu0 %v342, 117
    %v518 = vpop.permute.xlu0 %517
    %519 = vrot.lane.b32.xlu0 %v365, 117
    %v520 = vpop.permute.xlu0 %519
    %v521 = vsel %vm172, %v514, %v516
    %v522 = vsel %vm172, %v518, %v520
    %525 = vst [vmem:[#allocation3 + $0xb0] sm:$0xff] %v521
    %526 = vst [vmem:[#allocation3 + $0xb8] sm:$0xff] %v522
    %527 = vrot.lane.b32.xlu0 %v339, 116
    %v528 = vpop.permute.xlu0 %527
    %529 = vrot.lane.b32.xlu0 %v362, 116
    %v530 = vpop.permute.xlu0 %529
    %531 = vrot.lane.b32.xlu0 %v342, 116
    %v532 = vpop.permute.xlu0 %531
    %533 = vrot.lane.b32.xlu0 %v365, 116
    %v534 = vpop.permute.xlu0 %533
    %v535 = vsel %vm184, %v528, %v530
    %v536 = vsel %vm184, %v532, %v534
    %539 = vst [vmem:[#allocation3 + $0xc0] sm:$0xff] %v535
    %540 = vst [vmem:[#allocation3 + $0xc8] sm:$0xff] %v536
    %541 = vrot.lane.b32.xlu0 %v339, 115
    %v542 = vpop.permute.xlu0 %541
    %543 = vrot.lane.b32.xlu0 %v362, 115
    %v544 = vpop.permute.xlu0 %543
    %545 = vrot.lane.b32.xlu0 %v342, 115
    %v546 = vpop.permute.xlu0 %545
    %547 = vrot.lane.b32.xlu0 %v365, 115
    %v548 = vpop.permute.xlu0 %547
    %v549 = vsel %vm196, %v542, %v544
    %v550 = vsel %vm196, %v546, %v548
    %553 = vst [vmem:[#allocation3 + $0xd0] sm:$0xff] %v549
    %554 = vst [vmem:[#allocation3 + $0xd8] sm:$0xff] %v550
    %555 = vrot.lane.b32.xlu0 %v339, 114
    %v556 = vpop.permute.xlu0 %555
    %557 = vrot.lane.b32.xlu0 %v362, 114
    %v558 = vpop.permute.xlu0 %557
    %559 = vrot.lane.b32.xlu0 %v342, 114
    %v560 = vpop.permute.xlu0 %559
    %561 = vrot.lane.b32.xlu0 %v365, 114
    %v562 = vpop.permute.xlu0 %561
    %v563 = vsel %vm208, %v556, %v558
    %v564 = vsel %vm208, %v560, %v562
    %567 = vst [vmem:[#allocation3 + $0xe0] sm:$0xff] %v563
    %568 = vst [vmem:[#allocation3 + $0xe8] sm:$0xff] %v564
    %569 = vrot.lane.b32.xlu0 %v339, 113
    %v570 = vpop.permute.xlu0 %569
    %571 = vrot.lane.b32.xlu0 %v362, 113
    %v572 = vpop.permute.xlu0 %571
    %573 = vrot.lane.b32.xlu0 %v342, 113
    %v574 = vpop.permute.xlu0 %573
    %575 = vrot.lane.b32.xlu0 %v365, 113
    %v576 = vpop.permute.xlu0 %575
    %v577 = vsel %vm220, %v570, %v572
    %v578 = vsel %vm220, %v574, %v576
    %581 = vst [vmem:[#allocation3 + $0xf0] sm:$0xff] %v577
    %582 = vst [vmem:[#allocation3 + $0xf8] sm:$0xff] %v578
    %v583 = vld [vmem:[%s4] sm:$0xff]
    %v584 = vld [vmem:[%s4 + $0x8] sm:$0xff]
    %v585 = vld [vmem:[%s4 + $0x10] sm:$0xff]
    %v586 = vld [vmem:[%s4 + $0x18] sm:$0xff]
    %v587 = vld [vmem:[#allocation3] sm:$0xff]
    %v588 = vld [vmem:[#allocation3 + $0x8] sm:$0xff]
    %v589 = vld [vmem:[#allocation3 + $0x10] sm:$0xff]
    %v590 = vld [vmem:[#allocation3 + $0x18] sm:$0xff]
    %v591 = vld [vmem:[#allocation3 + $0x20] sm:$0xff]
    %v592 = vld [vmem:[#allocation3 + $0x28] sm:$0xff]
    %v593 = vld [vmem:[#allocation3 + $0x30] sm:$0xff]
    %v594 = vld [vmem:[#allocation3 + $0x38] sm:$0xff]
    %v595 = vld [vmem:[#allocation3 + $0x40] sm:$0xff]
    %v596 = vld [vmem:[#allocation3 + $0x48] sm:$0xff]
    %v597 = vld [vmem:[#allocation3 + $0x50] sm:$0xff]
    %v598 = vld [vmem:[#allocation3 + $0x58] sm:$0xff]
    %v599 = vld [vmem:[#allocation3 + $0x60] sm:$0xff]
    %v600 = vld [vmem:[#allocation3 + $0x68] sm:$0xff]
    %v601 = vld [vmem:[#allocation3 + $0x70] sm:$0xff]
    %v602 = vld [vmem:[#allocation3 + $0x78] sm:$0xff]
    %v603 = vld [vmem:[#allocation3 + $0x80] sm:$0xff]
    %v604 = vld [vmem:[#allocation3 + $0x88] sm:$0xff]
    %v605 = vld [vmem:[#allocation3 + $0x90] sm:$0xff]
    %v606 = vld [vmem:[#allocation3 + $0x98] sm:$0xff]
    %v607 = vld [vmem:[#allocation3 + $0xa0] sm:$0xff]
    %v608 = vld [vmem:[#allocation3 + $0xa8] sm:$0xff]
    %v609 = vld [vmem:[#allocation3 + $0xb0] sm:$0xff]
    %v610 = vld [vmem:[#allocation3 + $0xb8] sm:$0xff]
    %v611 = vld [vmem:[#allocation3 + $0xc0] sm:$0xff]
    %v612 = vld [vmem:[#allocation3 + $0xc8] sm:$0xff]
    %v613 = vld [vmem:[#allocation3 + $0xd0] sm:$0xff]
    %v614 = vld [vmem:[#allocation3 + $0xd8] sm:$0xff]
    %v615 = vld [vmem:[#allocation3 + $0xe0] sm:$0xff]
    %v616 = vld [vmem:[#allocation3 + $0xe8] sm:$0xff]
    %v617 = vld [vmem:[#allocation3 + $0xf0] sm:$0xff]
    %v618 = vld [vmem:[#allocation3 + $0xf8] sm:$0xff]
    %v619 = vld [vmem:[%s5] sm:$0xff]
    %v620 = vld [vmem:[%s5 + $0x8] sm:$0xff]
    %622 = vset.pattern.permute.xlu0 0
    %623 = vperm.xlu0 %622, %v619
    %v624 = vpop.permute.xlu0 %623
    %627 = vset.pattern.permute.xlu0 0
    %628 = vperm.xlu0 %627, %v620
    %v629 = vpop.permute.xlu0 %628
    %631 = vmatpush.msra.mxu0 %v602
    %632 = vmatpush.msra.mxu0 %v601
    %633 = vmatpush.msra.mxu0 %v600
    %634 = vmatpush.msra.mxu0 %v599
    %635 = vmatpush.msra.mxu0 %v598
    %636 = vmatpush.msra.mxu0 %v597
    %637 = vmatpush.msra.mxu0 %v596
    %638 = vmatpush.msra.mxu0 %v595
    %639 = vmatpush.msra.mxu0 %v594
    %640 = vmatpush.msra.mxu0 %v593
    %641 = vmatpush.msra.mxu0 %v592
    %642 = vmatpush.msra.mxu0 %v591
    %643 = vmatpush.msra.mxu0 %v590
    %644 = vmatpush.msra.mxu0 %v589
    %645 = vmatpush.msra.mxu0 %v588
    %646 = vmatpush.msra.mxu0 %v587
    %647 = vmatmul.f32.gmra.mxu0 %v583
    %v648 = vpop.f32.mrf.mxu0
    %v649 = vadd.f32 %v624, %v648
    %650 = vmatmul.f32.gmra.mxu0 %v585
    %v651 = vpop.f32.mrf.mxu0
    %v652 = vadd.f32 %v629, %v651
    %653 = vdwg.mxu0
    %654 = vmatpush.msra.mxu0 %v618
    %655 = vmatpush.msra.mxu0 %v617
    %656 = vmatpush.msra.mxu0 %v616
    %657 = vmatpush.msra.mxu0 %v615
    %658 = vmatpush.msra.mxu0 %v614
    %659 = vmatpush.msra.mxu0 %v613
    %660 = vmatpush.msra.mxu0 %v612
    %661 = vmatpush.msra.mxu0 %v611
    %662 = vmatpush.msra.mxu0 %v610
    %663 = vmatpush.msra.mxu0 %v609
    %664 = vmatpush.msra.mxu0 %v608
    %665 = vmatpush.msra.mxu0 %v607
    %666 = vmatpush.msra.mxu0 %v606
    %667 = vmatpush.msra.mxu0 %v605
    %668 = vmatpush.msra.mxu0 %v604
    %669 = vmatpush.msra.mxu0 %v603
    %670 = vmatmul.f32.gmra.mxu0 %v584
    %v671 = vpop.f32.mrf.mxu0
    %v672 = vadd.f32 %v649, %v671
    %673 = vmatmul.f32.gmra.mxu0 %v586
    %v674 = vpop.f32.mrf.mxu0
    %v675 = vadd.f32 %v652, %v674
    %676 = vdwg.mxu0
    %vm677 = vcmp.gt.f32.partialorder %v672, 0.0
    %vm678 = vcmp.gt.f32.partialorder %v675, 0.0
    %v679 = vmin.f32 %v672, 0.0
    %v680 = vmin.f32 %v675, 0.0
    %v681 = vmul.f32 %v679, 1.442695
    %v682 = vpow.pop %v681
    %v683 = vmul.f32 %v680, 1.442695
    %v684 = vpow.pop %v683
    %v685 = vsub.f32 %v682, 1.0
    %v686 = vsub.f32 %v684, 1.0
    %v687 = vsel %vm677, %v672, %v685
    %v688 = vsel %vm678, %v675, %v686
    %v689 = vld [vmem:[%s6] sm:$0xff]
    %v690 = vld [vmem:[%s6 + $0x8] sm:$0xff]
    %v691 = vld [vmem:[%s6 + $0x10] sm:$0xff]
    %v692 = vld [vmem:[%s6 + $0x18] sm:$0xff]
    %v693 = vld [vmem:[%s6 + $0x20] sm:$0xff]
    %v694 = vld [vmem:[%s6 + $0x28] sm:$0xff]
    %v695 = vld [vmem:[%s6 + $0x30] sm:$0xff]
    %v696 = vld [vmem:[%s6 + $0x38] sm:$0xff]
    %v697 = vld [vmem:[%s6 + $0x40] sm:$0xff]
    %v698 = vld [vmem:[%s6 + $0x48] sm:$0xff]
    %v699 = vld [vmem:[%s6 + $0x50] sm:$0xff]
    %v700 = vld [vmem:[%s6 + $0x58] sm:$0xff]
    %v701 = vld [vmem:[%s6 + $0x60] sm:$0xff]
    %v702 = vld [vmem:[%s6 + $0x68] sm:$0xff]
    %v703 = vld [vmem:[%s6 + $0x70] sm:$0xff]
    %v704 = vld [vmem:[%s6 + $0x78] sm:$0xff]
    %705 = vmatpush.msra.mxu0 %v704
    %706 = vmatpush.msra.mxu0 %v703
    %707 = vmatpush.msra.mxu0 %v702
    %708 = vmatpush.msra.mxu0 %v701
    %709 = vmatpush.msra.mxu0 %v700
    %710 = vmatpush.msra.mxu0 %v699
    %711 = vmatpush.msra.mxu0 %v698
    %712 = vmatpush.msra.mxu0 %v697
    %713 = vmatpush.msra.mxu0 %v696
    %714 = vmatpush.msra.mxu0 %v695
    %715 = vmatpush.msra.mxu0 %v694
    %716 = vmatpush.msra.mxu0 %v693
    %717 = vmatpush.msra.mxu0 %v692
    %718 = vmatpush.msra.mxu0 %v691
    %719 = vmatpush.msra.mxu0 %v690
    %720 = vmatpush.msra.mxu0 %v689
    %721 = vmatmul.f32.gmra.mxu0 %v687
    %v722 = vpop.f32.mrf.mxu0
    %v723 = vadd.f32 0.0, %v722
    %724 = vmatmul.f32.gmra.mxu0 %v688
    %v725 = vpop.f32.mrf.mxu0
    %v726 = vadd.f32 0.0, %v725
    %727 = vdwg.mxu0
    %vm728 = vcmask 15360
    %729 = vst.msk [vmem:[%s7] sm:$0xff] %vm728, %v723
    %730 = vst.msk [vmem:[%s7 + $0x8] sm:$0xff] %vm728, %v726
    // Predicated region
    $region34: #{eegnet_forward.1} parent=1 // pred_check
      _
    $region35: #{eegnet_forward.1} parent=1 // pred_check_branch
      %732 = sbr.rel (0) target = $region37
    $region36: #{eegnet_forward.1} parent=1 // pred_region
      _
    $region37: #{eegnet_forward.1} parent=1 // pred_fallthru
      _
    // Predicated region
    $region38: #{eegnet_forward.1} parent=1 // pred_check
      _
    $region39: #{eegnet_forward.1} parent=1 // pred_check_branch
      %734 = sbr.rel (0) target = $region41
    $region40: #{eegnet_forward.1} parent=1 // pred_region
      _
    $region41: #{eegnet_forward.1} parent=1 // pred_fallthru
      _
    %735 = vsyncpa [#allocation5], 1

</llo_original>
